<compile_context>
chip_gen: v7x
topology: tpu7x:2x2x1
jax: 0.10.0
libtpu: 0.0.40
codegen_flags: <defaults>
</compile_context>

<pallas_src>
import functools

import jax
import jax.numpy as jnp
from jax.experimental import pallas as pl
from jax.experimental.pallas import tpu as pltpu


def _cdiv(a, b):
    return -(-a // b)


def _round_up(a, b):
    return _cdiv(a, b) * b


def _embedder_kernel(x_ref, o_ref, *, L, D, G, out_d, use_recurrence):
    """Positional-encoding hot path on a lane-dense block.

    x_ref: (tile, G*D)      -- G original rows packed along the lane axis.
    o_ref: (tile, G*out_d)  -- same G rows, each row laid out as [x | sin/cos bands].
    """
    x = x_ref[...].astype(jnp.float32)  # upcast once (bf16-safe); no-op for f32

    def store_band(b, v):
        # Band `b` of original row r lives at grouped columns [r*out_d + b*D, +D).
        v = v.astype(o_ref.dtype)
        for r in range(G):
            o_ref[:, r * out_d + b * D: r * out_d + (b + 1) * D] = v[:, r * D:(r + 1) * D]

    store_band(0, x)

    if L > 0:
        if use_recurrence:
            s = jnp.sin(x)
            c = jnp.cos(x)
            store_band(1, s)
            store_band(2, c)
            for i in range(1, L):
                # sin(2y) = 2 sin y cos y ; cos(2y) = cos^2 y - sin^2 y  (VPU only)
                s, c = 2.0 * s * c, c * c - s * s
                store_band(2 * i + 1, s)
                store_band(2 * i + 2, c)
        else:
            xi = x
            for i in range(L):
                store_band(2 * i + 1, jnp.sin(xi))
                store_band(2 * i + 2, jnp.cos(xi))
                if i + 1 < L:
                    xi = xi + xi  # hoisted frequency scaling (no 2**i multiply)


def embedder(x, positional_encoding_dim, *, tile_rows=1024, use_recurrence=True):
    """JAX/Pallas equivalent of Embedder(positional_encoding_dim).forward(x)."""
    L = int(positional_encoding_dim)
    orig_shape = x.shape
    D = int(orig_shape[-1])
    out_d = D * (1 + 2 * L)

    N = 1
    for s in orig_shape[:-1]:
        N *= int(s)

    # Lane density: pack G rows along the lane axis so both block last-dims are
    # multiples of 128 (e.g. D=16, L=4 -> in 128, out 1152). Falls back to G=1
    # (full-dim blocks) when D does not divide 128.
    if 0 < D < 128 and 128 % D == 0:
        G = 128 // D
    else:
        G = 1

    x2d = x.reshape(N, D)

    # Tile sizing: as large as possible (HBM roofline), but
    #  (a) double-buffered in+out blocks stay well under the smallest scoped VMEM
    #      limits across generations, and
    #  (b) keep a few grid steps so the "parallel" axis can be split across the
    #      two TensorCores on v7x.
    itemsize = jnp.dtype(x.dtype).itemsize
    vmem_budget = 24 * 1024 * 1024
    bytes_per_grouped_row = 2 * G * (D + out_d) * itemsize  # in + out, double-buffered
    tile_cap = max(8, (vmem_budget // max(bytes_per_grouped_row, 1)) // 8 * 8)

    Ng = _cdiv(N, G)
    tile = min(int(tile_rows), tile_cap, _round_up(_cdiv(Ng, 4), 8))
    tile = max(8, _round_up(tile, 8))

    Ng_pad = _round_up(max(Ng, tile), tile)
    N_pad = Ng_pad * G
    if N_pad != N:
        x2d = jnp.pad(x2d, ((0, N_pad - N), (0, 0)))  # zero pad rows; sliced off below

    xg = x2d.reshape(Ng_pad, G * D)  # contiguous (free) reshape
    grid = (Ng_pad // tile,)

    kernel = functools.partial(
        _embedder_kernel, L=L, D=D, G=G, out_d=out_d, use_recurrence=use_recurrence
    )

    out_g = pl.pallas_call(
        kernel,
        out_shape=jax.ShapeDtypeStruct((Ng_pad, G * out_d), x.dtype),
        grid_spec=pltpu.PrefetchScalarGridSpec(
            num_scalar_prefetch=0,
            grid=grid,
            in_specs=[pl.BlockSpec((tile, G * D), lambda i: (i, 0))],
            out_specs=pl.BlockSpec((tile, G * out_d), lambda i: (i, 0)),
        ),
        compiler_params=pltpu.CompilerParams(
            dimension_semantics=("parallel",),
            vmem_limit_bytes=32 * 1024 * 1024,
        ),
    )(xg)

    out2d = out_g.reshape(N_pad, out_d)[:N]
    return out2d.reshape(*orig_shape[:-1], out_d)


def embedder_ref(x, L):
    """Pure-JAX reference matching the PyTorch forward exactly."""
    res = [x]
    for i in range(L):
        res.append(jnp.sin((2.0 ** i) * x))
        res.append(jnp.cos((2.0 ** i) * x))
    return jnp.concatenate(res, axis=-1)


if __name__ == "__main__":
    key = jax.random.PRNGKey(0)

    # Small shapes consistent with the module: batch=2, seq=8, feature=16, L=4.
    B, S, D = 2, 8, 16
    L = 4
    x = jax.random.normal(key, (B, S, D), dtype=jnp.float32)

    out = embedder(x, L)
    out = jax.block_until_ready(out)

    ref = embedder_ref(x, L)
    assert out.shape == (B, S, D * (1 + 2 * L)), out.shape
    assert out.dtype == x.dtype
    # Doubling recurrence accumulates ~a few ulps per frequency step; loose-ish atol.
    assert jnp.allclose(out, ref, atol=5e-5, rtol=1e-4), "mismatch vs reference"

    # Second check: ragged row count (exercises padding path) + direct-eval fallback.
    x2 = jax.random.normal(jax.random.PRNGKey(1), (3, 5, 16), dtype=jnp.float32)
    out2 = jax.block_until_ready(embedder(x2, L, use_recurrence=False))
    ref2 = embedder_ref(x2, L)
    assert out2.shape == (3, 5, 16 * (1 + 2 * L))
    assert jnp.allclose(out2, ref2, atol=1e-5, rtol=1e-5), "mismatch vs reference (ragged)"

    print("KERNEL_OK")
</pallas_src>

<mosaic_0001>
module attributes {stable_mosaic.version = 11 : i64} {
  func.func @_embedder_kernel(%arg0: i32, %arg1: memref<8x128xf32, #tpu.memory_space<vmem>>, %arg2: memref<8x1152xf32, #tpu.memory_space<vmem>>) attributes {dimension_semantics = [#tpu.dimension_semantics<parallel>], iteration_bounds = array<i64: 1>, scalar_prefetch = 0 : i64, scratch_operands = 0 : i64, tpu.core_type = #tpu.core_type<tc>, window_params = [{transform_indices = @transform_0, window_bounds = array<i64: 8, 128>}, {transform_indices = @transform_1, window_bounds = array<i64: 8, 1152>}]} {
    %c0 = arith.constant 0 : index
    %c0_0 = arith.constant 0 : index
    %0 = vector.load %arg1[%c0, %c0_0] : memref<8x128xf32, #tpu.memory_space<vmem>>, vector<8x128xf32>
    %1 = vector.extract_strided_slice %0 {offsets = [0, 0], sizes = [8, 16], strides = [1, 1]} : vector<8x128xf32> to vector<8x16xf32>
    %c0_1 = arith.constant 0 : index
    %c0_2 = arith.constant 0 : index
    %2 = vector.load %arg2[%c0_1, %c0_2] : memref<8x1152xf32, #tpu.memory_space<vmem>>, vector<8x16xf32>
    tpu.vector_store %arg2[%c0_1, %c0_2], %1 {strides = array<i32>} : memref<8x1152xf32, #tpu.memory_space<vmem>>, vector<8x16xf32>,
    %3 = vector.extract_strided_slice %0 {offsets = [0, 16], sizes = [8, 16], strides = [1, 1]} : vector<8x128xf32> to vector<8x16xf32>
    %c0_3 = arith.constant 0 : index
    %c144 = arith.constant 144 : index
    %4 = vector.load %arg2[%c0_3, %c144] : memref<8x1152xf32, #tpu.memory_space<vmem>>, vector<8x16xf32>
    tpu.vector_store %arg2[%c0_3, %c144], %3 {strides = array<i32>} : memref<8x1152xf32, #tpu.memory_space<vmem>>, vector<8x16xf32>,
    %5 = vector.extract_strided_slice %0 {offsets = [0, 32], sizes = [8, 16], strides = [1, 1]} : vector<8x128xf32> to vector<8x16xf32>
    %c0_4 = arith.constant 0 : index
    %c288 = arith.constant 288 : index
    %6 = vector.load %arg2[%c0_4, %c288] : memref<8x1152xf32, #tpu.memory_space<vmem>>, vector<8x16xf32>
    tpu.vector_store %arg2[%c0_4, %c288], %5 {strides = array<i32>} : memref<8x1152xf32, #tpu.memory_space<vmem>>, vector<8x16xf32>,
    %7 = vector.extract_strided_slice %0 {offsets = [0, 48], sizes = [8, 16], strides = [1, 1]} : vector<8x128xf32> to vector<8x16xf32>
    %c0_5 = arith.constant 0 : index
    %c432 = arith.constant 432 : index
    %8 = vector.load %arg2[%c0_5, %c432] : memref<8x1152xf32, #tpu.memory_space<vmem>>, vector<8x16xf32>
    tpu.vector_store %arg2[%c0_5, %c432], %7 {strides = array<i32>} : memref<8x1152xf32, #tpu.memory_space<vmem>>, vector<8x16xf32>,
    %9 = vector.extract_strided_slice %0 {offsets = [0, 64], sizes = [8, 16], strides = [1, 1]} : vector<8x128xf32> to vector<8x16xf32>
    %c0_6 = arith.constant 0 : index
    %c576 = arith.constant 576 : index
    %10 = vector.load %arg2[%c0_6, %c576] : memref<8x1152xf32, #tpu.memory_space<vmem>>, vector<8x16xf32>
    tpu.vector_store %arg2[%c0_6, %c576], %9 {strides = array<i32>} : memref<8x1152xf32, #tpu.memory_space<vmem>>, vector<8x16xf32>,
    %11 = vector.extract_strided_slice %0 {offsets = [0, 80], sizes = [8, 16], strides = [1, 1]} : vector<8x128xf32> to vector<8x16xf32>
    %c0_7 = arith.constant 0 : index
    %c720 = arith.constant 720 : index
    %12 = vector.load %arg2[%c0_7, %c720] : memref<8x1152xf32, #tpu.memory_space<vmem>>, vector<8x16xf32>
    tpu.vector_store %arg2[%c0_7, %c720], %11 {strides = array<i32>} : memref<8x1152xf32, #tpu.memory_space<vmem>>, vector<8x16xf32>,
    %13 = vector.extract_strided_slice %0 {offsets = [0, 96], sizes = [8, 16], strides = [1, 1]} : vector<8x128xf32> to vector<8x16xf32>
    %c0_8 = arith.constant 0 : index
    %c864 = arith.constant 864 : index
    %14 = vector.load %arg2[%c0_8, %c864] : memref<8x1152xf32, #tpu.memory_space<vmem>>, vector<8x16xf32>
    tpu.vector_store %arg2[%c0_8, %c864], %13 {strides = array<i32>} : memref<8x1152xf32, #tpu.memory_space<vmem>>, vector<8x16xf32>,
    %15 = vector.extract_strided_slice %0 {offsets = [0, 112], sizes = [8, 16], strides = [1, 1]} : vector<8x128xf32> to vector<8x16xf32>
    %c0_9 = arith.constant 0 : index
    %c1008 = arith.constant 1008 : index
    %16 = vector.load %arg2[%c0_9, %c1008] : memref<8x1152xf32, #tpu.memory_space<vmem>>, vector<8x16xf32>
    tpu.vector_store %arg2[%c0_9, %c1008], %15 {strides = array<i32>} : memref<8x1152xf32, #tpu.memory_space<vmem>>, vector<8x16xf32>,
    %17 = math.sin %0 : vector<8x128xf32>
    %18 = math.cos %0 : vector<8x128xf32>
    %19 = vector.extract_strided_slice %17 {offsets = [0, 0], sizes = [8, 16], strides = [1, 1]} : vector<8x128xf32> to vector<8x16xf32>
    %c0_10 = arith.constant 0 : index
    %c16 = arith.constant 16 : index
    %20 = vector.load %arg2[%c0_10, %c16] : memref<8x1152xf32, #tpu.memory_space<vmem>>, vector<8x16xf32>
    tpu.vector_store %arg2[%c0_10, %c16], %19 {strides = array<i32>} : memref<8x1152xf32, #tpu.memory_space<vmem>>, vector<8x16xf32>,
    %21 = vector.extract_strided_slice %17 {offsets = [0, 16], sizes = [8, 16], strides = [1, 1]} : vector<8x128xf32> to vector<8x16xf32>
    %c0_11 = arith.constant 0 : index
    %c160 = arith.constant 160 : index
    %22 = vector.load %arg2[%c0_11, %c160] : memref<8x1152xf32, #tpu.memory_space<vmem>>, vector<8x16xf32>
    tpu.vector_store %arg2[%c0_11, %c160], %21 {strides = array<i32>} : memref<8x1152xf32, #tpu.memory_space<vmem>>, vector<8x16xf32>,
    %23 = vector.extract_strided_slice %17 {offsets = [0, 32], sizes = [8, 16], strides = [1, 1]} : vector<8x128xf32> to vector<8x16xf32>
    %c0_12 = arith.constant 0 : index
    %c304 = arith.constant 304 : index
    %24 = vector.load %arg2[%c0_12, %c304] : memref<8x1152xf32, #tpu.memory_space<vmem>>, vector<8x16xf32>
    tpu.vector_store %arg2[%c0_12, %c304], %23 {strides = array<i32>} : memref<8x1152xf32, #tpu.memory_space<vmem>>, vector<8x16xf32>,
    %25 = vector.extract_strided_slice %17 {offsets = [0, 48], sizes = [8, 16], strides = [1, 1]} : vector<8x128xf32> to vector<8x16xf32>
    %c0_13 = arith.constant 0 : index
    %c448 = arith.constant 448 : index
    %26 = vector.load %arg2[%c0_13, %c448] : memref<8x1152xf32, #tpu.memory_space<vmem>>, vector<8x16xf32>
    tpu.vector_store %arg2[%c0_13, %c448], %25 {strides = array<i32>} : memref<8x1152xf32, #tpu.memory_space<vmem>>, vector<8x16xf32>,
    %27 = vector.extract_strided_slice %17 {offsets = [0, 64], sizes = [8, 16], strides = [1, 1]} : vector<8x128xf32> to vector<8x16xf32>
    %c0_14 = arith.constant 0 : index
    %c592 = arith.constant 592 : index
    %28 = vector.load %arg2[%c0_14, %c592] : memref<8x1152xf32, #tpu.memory_space<vmem>>, vector<8x16xf32>
    tpu.vector_store %arg2[%c0_14, %c592], %27 {strides = array<i32>} : memref<8x1152xf32, #tpu.memory_space<vmem>>, vector<8x16xf32>,
    %29 = vector.extract_strided_slice %17 {offsets = [0, 80], sizes = [8, 16], strides = [1, 1]} : vector<8x128xf32> to vector<8x16xf32>
    %c0_15 = arith.constant 0 : index
    %c736 = arith.constant 736 : index
    %30 = vector.load %arg2[%c0_15, %c736] : memref<8x1152xf32, #tpu.memory_space<vmem>>, vector<8x16xf32>
    tpu.vector_store %arg2[%c0_15, %c736], %29 {strides = array<i32>} : memref<8x1152xf32, #tpu.memory_space<vmem>>, vector<8x16xf32>,
    %31 = vector.extract_strided_slice %17 {offsets = [0, 96], sizes = [8, 16], strides = [1, 1]} : vector<8x128xf32> to vector<8x16xf32>
    %c0_16 = arith.constant 0 : index
    %c880 = arith.constant 880 : index
    %32 = vector.load %arg2[%c0_16, %c880] : memref<8x1152xf32, #tpu.memory_space<vmem>>, vector<8x16xf32>
    tpu.vector_store %arg2[%c0_16, %c880], %31 {strides = array<i32>} : memref<8x1152xf32, #tpu.memory_space<vmem>>, vector<8x16xf32>,
    %33 = vector.extract_strided_slice %17 {offsets = [0, 112], sizes = [8, 16], strides = [1, 1]} : vector<8x128xf32> to vector<8x16xf32>
    %c0_17 = arith.constant 0 : index
    %c1024 = arith.constant 1024 : index
    %34 = vector.load %arg2[%c0_17, %c1024] : memref<8x1152xf32, #tpu.memory_space<vmem>>, vector<8x16xf32>
    tpu.vector_store %arg2[%c0_17, %c1024], %33 {strides = array<i32>} : memref<8x1152xf32, #tpu.memory_space<vmem>>, vector<8x16xf32>,
    %35 = vector.extract_strided_slice %18 {offsets = [0, 0], sizes = [8, 16], strides = [1, 1]} : vector<8x128xf32> to vector<8x16xf32>
    %c0_18 = arith.constant 0 : index
    %c32 = arith.constant 32 : index
    %36 = vector.load %arg2[%c0_18, %c32] : memref<8x1152xf32, #tpu.memory_space<vmem>>, vector<8x16xf32>
    tpu.vector_store %arg2[%c0_18, %c32], %35 {strides = array<i32>} : memref<8x1152xf32, #tpu.memory_space<vmem>>, vector<8x16xf32>,
    %37 = vector.extract_strided_slice %18 {offsets = [0, 16], sizes = [8, 16], strides = [1, 1]} : vector<8x128xf32> to vector<8x16xf32>
    %c0_19 = arith.constant 0 : index
    %c176 = arith.constant 176 : index
    %38 = vector.load %arg2[%c0_19, %c176] : memref<8x1152xf32, #tpu.memory_space<vmem>>, vector<8x16xf32>
    tpu.vector_store %arg2[%c0_19, %c176], %37 {strides = array<i32>} : memref<8x1152xf32, #tpu.memory_space<vmem>>, vector<8x16xf32>,
    %39 = vector.extract_strided_slice %18 {offsets = [0, 32], sizes = [8, 16], strides = [1, 1]} : vector<8x128xf32> to vector<8x16xf32>
    %c0_20 = arith.constant 0 : index
    %c320 = arith.constant 320 : index
    %40 = vector.load %arg2[%c0_20, %c320] : memref<8x1152xf32, #tpu.memory_space<vmem>>, vector<8x16xf32>
    tpu.vector_store %arg2[%c0_20, %c320], %39 {strides = array<i32>} : memref<8x1152xf32, #tpu.memory_space<vmem>>, vector<8x16xf32>,
    %41 = vector.extract_strided_slice %18 {offsets = [0, 48], sizes = [8, 16], strides = [1, 1]} : vector<8x128xf32> to vector<8x16xf32>
    %c0_21 = arith.constant 0 : index
    %c464 = arith.constant 464 : index
    %42 = vector.load %arg2[%c0_21, %c464] : memref<8x1152xf32, #tpu.memory_space<vmem>>, vector<8x16xf32>
    tpu.vector_store %arg2[%c0_21, %c464], %41 {strides = array<i32>} : memref<8x1152xf32, #tpu.memory_space<vmem>>, vector<8x16xf32>,
    %43 = vector.extract_strided_slice %18 {offsets = [0, 64], sizes = [8, 16], strides = [1, 1]} : vector<8x128xf32> to vector<8x16xf32>
    %c0_22 = arith.constant 0 : index
    %c608 = arith.constant 608 : index
    %44 = vector.load %arg2[%c0_22, %c608] : memref<8x1152xf32, #tpu.memory_space<vmem>>, vector<8x16xf32>
    tpu.vector_store %arg2[%c0_22, %c608], %43 {strides = array<i32>} : memref<8x1152xf32, #tpu.memory_space<vmem>>, vector<8x16xf32>,
    %45 = vector.extract_strided_slice %18 {offsets = [0, 80], sizes = [8, 16], strides = [1, 1]} : vector<8x128xf32> to vector<8x16xf32>
    %c0_23 = arith.constant 0 : index
    %c752 = arith.constant 752 : index
    %46 = vector.load %arg2[%c0_23, %c752] : memref<8x1152xf32, #tpu.memory_space<vmem>>, vector<8x16xf32>
    tpu.vector_store %arg2[%c0_23, %c752], %45 {strides = array<i32>} : memref<8x1152xf32, #tpu.memory_space<vmem>>, vector<8x16xf32>,
    %47 = vector.extract_strided_slice %18 {offsets = [0, 96], sizes = [8, 16], strides = [1, 1]} : vector<8x128xf32> to vector<8x16xf32>
    %c0_24 = arith.constant 0 : index
    %c896 = arith.constant 896 : index
    %48 = vector.load %arg2[%c0_24, %c896] : memref<8x1152xf32, #tpu.memory_space<vmem>>, vector<8x16xf32>
    tpu.vector_store %arg2[%c0_24, %c896], %47 {strides = array<i32>} : memref<8x1152xf32, #tpu.memory_space<vmem>>, vector<8x16xf32>,
    %49 = vector.extract_strided_slice %18 {offsets = [0, 112], sizes = [8, 16], strides = [1, 1]} : vector<8x128xf32> to vector<8x16xf32>
    %c0_25 = arith.constant 0 : index
    %c1040 = arith.constant 1040 : index
    %50 = vector.load %arg2[%c0_25, %c1040] : memref<8x1152xf32, #tpu.memory_space<vmem>>, vector<8x16xf32>
    tpu.vector_store %arg2[%c0_25, %c1040], %49 {strides = array<i32>} : memref<8x1152xf32, #tpu.memory_space<vmem>>, vector<8x16xf32>,
    %cst = arith.constant 2.000000e+00 : f32
    %51 = vector.broadcast %cst : f32 to vector<8x128xf32>
    %52 = arith.mulf %51, %17 : vector<8x128xf32>
    %53 = arith.mulf %52, %18 : vector<8x128xf32>
    %54 = arith.mulf %18, %18 : vector<8x128xf32>
    %55 = arith.mulf %17, %17 : vector<8x128xf32>
    %56 = arith.subf %54, %55 : vector<8x128xf32>
    %57 = vector.extract_strided_slice %53 {offsets = [0, 0], sizes = [8, 16], strides = [1, 1]} : vector<8x128xf32> to vector<8x16xf32>
    %c0_26 = arith.constant 0 : index
    %c48 = arith.constant 48 : index
    %58 = vector.load %arg2[%c0_26, %c48] : memref<8x1152xf32, #tpu.memory_space<vmem>>, vector<8x16xf32>
    tpu.vector_store %arg2[%c0_26, %c48], %57 {strides = array<i32>} : memref<8x1152xf32, #tpu.memory_space<vmem>>, vector<8x16xf32>,
    %59 = vector.extract_strided_slice %53 {offsets = [0, 16], sizes = [8, 16], strides = [1, 1]} : vector<8x128xf32> to vector<8x16xf32>
    %c0_27 = arith.constant 0 : index
    %c192 = arith.constant 192 : index
    %60 = vector.load %arg2[%c0_27, %c192] : memref<8x1152xf32, #tpu.memory_space<vmem>>, vector<8x16xf32>
    tpu.vector_store %arg2[%c0_27, %c192], %59 {strides = array<i32>} : memref<8x1152xf32, #tpu.memory_space<vmem>>, vector<8x16xf32>,
    %61 = vector.extract_strided_slice %53 {offsets = [0, 32], sizes = [8, 16], strides = [1, 1]} : vector<8x128xf32> to vector<8x16xf32>
    %c0_28 = arith.constant 0 : index
    %c336 = arith.constant 336 : index
    %62 = vector.load %arg2[%c0_28, %c336] : memref<8x1152xf32, #tpu.memory_space<vmem>>, vector<8x16xf32>
    tpu.vector_store %arg2[%c0_28, %c336], %61 {strides = array<i32>} : memref<8x1152xf32, #tpu.memory_space<vmem>>, vector<8x16xf32>,
    %63 = vector.extract_strided_slice %53 {offsets = [0, 48], sizes = [8, 16], strides = [1, 1]} : vector<8x128xf32> to vector<8x16xf32>
    %c0_29 = arith.constant 0 : index
    %c480 = arith.constant 480 : index
    %64 = vector.load %arg2[%c0_29, %c480] : memref<8x1152xf32, #tpu.memory_space<vmem>>, vector<8x16xf32>
    tpu.vector_store %arg2[%c0_29, %c480], %63 {strides = array<i32>} : memref<8x1152xf32, #tpu.memory_space<vmem>>, vector<8x16xf32>,
    %65 = vector.extract_strided_slice %53 {offsets = [0, 64], sizes = [8, 16], strides = [1, 1]} : vector<8x128xf32> to vector<8x16xf32>
    %c0_30 = arith.constant 0 : index
    %c624 = arith.constant 624 : index
    %66 = vector.load %arg2[%c0_30, %c624] : memref<8x1152xf32, #tpu.memory_space<vmem>>, vector<8x16xf32>
    tpu.vector_store %arg2[%c0_30, %c624], %65 {strides = array<i32>} : memref<8x1152xf32, #tpu.memory_space<vmem>>, vector<8x16xf32>,
    %67 = vector.extract_strided_slice %53 {offsets = [0, 80], sizes = [8, 16], strides = [1, 1]} : vector<8x128xf32> to vector<8x16xf32>
    %c0_31 = arith.constant 0 : index
    %c768 = arith.constant 768 : index
    %68 = vector.load %arg2[%c0_31, %c768] : memref<8x1152xf32, #tpu.memory_space<vmem>>, vector<8x16xf32>
    tpu.vector_store %arg2[%c0_31, %c768], %67 {strides = array<i32>} : memref<8x1152xf32, #tpu.memory_space<vmem>>, vector<8x16xf32>,
    %69 = vector.extract_strided_slice %53 {offsets = [0, 96], sizes = [8, 16], strides = [1, 1]} : vector<8x128xf32> to vector<8x16xf32>
    %c0_32 = arith.constant 0 : index
    %c912 = arith.constant 912 : index
    %70 = vector.load %arg2[%c0_32, %c912] : memref<8x1152xf32, #tpu.memory_space<vmem>>, vector<8x16xf32>
    tpu.vector_store %arg2[%c0_32, %c912], %69 {strides = array<i32>} : memref<8x1152xf32, #tpu.memory_space<vmem>>, vector<8x16xf32>,
    %71 = vector.extract_strided_slice %53 {offsets = [0, 112], sizes = [8, 16], strides = [1, 1]} : vector<8x128xf32> to vector<8x16xf32>
    %c0_33 = arith.constant 0 : index
    %c1056 = arith.constant 1056 : index
    %72 = vector.load %arg2[%c0_33, %c1056] : memref<8x1152xf32, #tpu.memory_space<vmem>>, vector<8x16xf32>
    tpu.vector_store %arg2[%c0_33, %c1056], %71 {strides = array<i32>} : memref<8x1152xf32, #tpu.memory_space<vmem>>, vector<8x16xf32>,
    %73 = vector.extract_strided_slice %56 {offsets = [0, 0], sizes = [8, 16], strides = [1, 1]} : vector<8x128xf32> to vector<8x16xf32>
    %c0_34 = arith.constant 0 : index
    %c64 = arith.constant 64 : index
    %74 = vector.load %arg2[%c0_34, %c64] : memref<8x1152xf32, #tpu.memory_space<vmem>>, vector<8x16xf32>
    tpu.vector_store %arg2[%c0_34, %c64], %73 {strides = array<i32>} : memref<8x1152xf32, #tpu.memory_space<vmem>>, vector<8x16xf32>,
    %75 = vector.extract_strided_slice %56 {offsets = [0, 16], sizes = [8, 16], strides = [1, 1]} : vector<8x128xf32> to vector<8x16xf32>
    %c0_35 = arith.constant 0 : index
    %c208 = arith.constant 208 : index
    %76 = vector.load %arg2[%c0_35, %c208] : memref<8x1152xf32, #tpu.memory_space<vmem>>, vector<8x16xf32>
    tpu.vector_store %arg2[%c0_35, %c208], %75 {strides = array<i32>} : memref<8x1152xf32, #tpu.memory_space<vmem>>, vector<8x16xf32>,
    %77 = vector.extract_strided_slice %56 {offsets = [0, 32], sizes = [8, 16], strides = [1, 1]} : vector<8x128xf32> to vector<8x16xf32>
    %c0_36 = arith.constant 0 : index
    %c352 = arith.constant 352 : index
    %78 = vector.load %arg2[%c0_36, %c352] : memref<8x1152xf32, #tpu.memory_space<vmem>>, vector<8x16xf32>
    tpu.vector_store %arg2[%c0_36, %c352], %77 {strides = array<i32>} : memref<8x1152xf32, #tpu.memory_space<vmem>>, vector<8x16xf32>,
    %79 = vector.extract_strided_slice %56 {offsets = [0, 48], sizes = [8, 16], strides = [1, 1]} : vector<8x128xf32> to vector<8x16xf32>
    %c0_37 = arith.constant 0 : index
    %c496 = arith.constant 496 : index
    %80 = vector.load %arg2[%c0_37, %c496] : memref<8x1152xf32, #tpu.memory_space<vmem>>, vector<8x16xf32>
    tpu.vector_store %arg2[%c0_37, %c496], %79 {strides = array<i32>} : memref<8x1152xf32, #tpu.memory_space<vmem>>, vector<8x16xf32>,
    %81 = vector.extract_strided_slice %56 {offsets = [0, 64], sizes = [8, 16], strides = [1, 1]} : vector<8x128xf32> to vector<8x16xf32>
    %c0_38 = arith.constant 0 : index
    %c640 = arith.constant 640 : index
    %82 = vector.load %arg2[%c0_38, %c640] : memref<8x1152xf32, #tpu.memory_space<vmem>>, vector<8x16xf32>
    tpu.vector_store %arg2[%c0_38, %c640], %81 {strides = array<i32>} : memref<8x1152xf32, #tpu.memory_space<vmem>>, vector<8x16xf32>,
    %83 = vector.extract_strided_slice %56 {offsets = [0, 80], sizes = [8, 16], strides = [1, 1]} : vector<8x128xf32> to vector<8x16xf32>
    %c0_39 = arith.constant 0 : index
    %c784 = arith.constant 784 : index
    %84 = vector.load %arg2[%c0_39, %c784] : memref<8x1152xf32, #tpu.memory_space<vmem>>, vector<8x16xf32>
    tpu.vector_store %arg2[%c0_39, %c784], %83 {strides = array<i32>} : memref<8x1152xf32, #tpu.memory_space<vmem>>, vector<8x16xf32>,
    %85 = vector.extract_strided_slice %56 {offsets = [0, 96], sizes = [8, 16], strides = [1, 1]} : vector<8x128xf32> to vector<8x16xf32>
    %c0_40 = arith.constant 0 : index
    %c928 = arith.constant 928 : index
    %86 = vector.load %arg2[%c0_40, %c928] : memref<8x1152xf32, #tpu.memory_space<vmem>>, vector<8x16xf32>
    tpu.vector_store %arg2[%c0_40, %c928], %85 {strides = array<i32>} : memref<8x1152xf32, #tpu.memory_space<vmem>>, vector<8x16xf32>,
    %87 = vector.extract_strided_slice %56 {offsets = [0, 112], sizes = [8, 16], strides = [1, 1]} : vector<8x128xf32> to vector<8x16xf32>
    %c0_41 = arith.constant 0 : index
    %c1072 = arith.constant 1072 : index
    %88 = vector.load %arg2[%c0_41, %c1072] : memref<8x1152xf32, #tpu.memory_space<vmem>>, vector<8x16xf32>
    tpu.vector_store %arg2[%c0_41, %c1072], %87 {strides = array<i32>} : memref<8x1152xf32, #tpu.memory_space<vmem>>, vector<8x16xf32>,
    %cst_42 = arith.constant 2.000000e+00 : f32
    %89 = vector.broadcast %cst_42 : f32 to vector<8x128xf32>
    %90 = arith.mulf %89, %53 : vector<8x128xf32>
    %91 = arith.mulf %90, %56 : vector<8x128xf32>
    %92 = arith.mulf %56, %56 : vector<8x128xf32>
    %93 = arith.mulf %53, %53 : vector<8x128xf32>
    %94 = arith.subf %92, %93 : vector<8x128xf32>
    %95 = vector.extract_strided_slice %91 {offsets = [0, 0], sizes = [8, 16], strides = [1, 1]} : vector<8x128xf32> to vector<8x16xf32>
    %c0_43 = arith.constant 0 : index
    %c80 = arith.constant 80 : index
    %96 = vector.load %arg2[%c0_43, %c80] : memref<8x1152xf32, #tpu.memory_space<vmem>>, vector<8x16xf32>
    tpu.vector_store %arg2[%c0_43, %c80], %95 {strides = array<i32>} : memref<8x1152xf32, #tpu.memory_space<vmem>>, vector<8x16xf32>,
    %97 = vector.extract_strided_slice %91 {offsets = [0, 16], sizes = [8, 16], strides = [1, 1]} : vector<8x128xf32> to vector<8x16xf32>
    %c0_44 = arith.constant 0 : index
    %c224 = arith.constant 224 : index
    %98 = vector.load %arg2[%c0_44, %c224] : memref<8x1152xf32, #tpu.memory_space<vmem>>, vector<8x16xf32>
    tpu.vector_store %arg2[%c0_44, %c224], %97 {strides = array<i32>} : memref<8x1152xf32, #tpu.memory_space<vmem>>, vector<8x16xf32>,
    %99 = vector.extract_strided_slice %91 {offsets = [0, 32], sizes = [8, 16], strides = [1, 1]} : vector<8x128xf32> to vector<8x16xf32>
    %c0_45 = arith.constant 0 : index
    %c368 = arith.constant 368 : index
    %100 = vector.load %arg2[%c0_45, %c368] : memref<8x1152xf32, #tpu.memory_space<vmem>>, vector<8x16xf32>
    tpu.vector_store %arg2[%c0_45, %c368], %99 {strides = array<i32>} : memref<8x1152xf32, #tpu.memory_space<vmem>>, vector<8x16xf32>,
    %101 = vector.extract_strided_slice %91 {offsets = [0, 48], sizes = [8, 16], strides = [1, 1]} : vector<8x128xf32> to vector<8x16xf32>
    %c0_46 = arith.constant 0 : index
    %c512 = arith.constant 512 : index
    %102 = vector.load %arg2[%c0_46, %c512] : memref<8x1152xf32, #tpu.memory_space<vmem>>, vector<8x16xf32>
    tpu.vector_store %arg2[%c0_46, %c512], %101 {strides = array<i32>} : memref<8x1152xf32, #tpu.memory_space<vmem>>, vector<8x16xf32>,
    %103 = vector.extract_strided_slice %91 {offsets = [0, 64], sizes = [8, 16], strides = [1, 1]} : vector<8x128xf32> to vector<8x16xf32>
    %c0_47 = arith.constant 0 : index
    %c656 = arith.constant 656 : index
    %104 = vector.load %arg2[%c0_47, %c656] : memref<8x1152xf32, #tpu.memory_space<vmem>>, vector<8x16xf32>
    tpu.vector_store %arg2[%c0_47, %c656], %103 {strides = array<i32>} : memref<8x1152xf32, #tpu.memory_space<vmem>>, vector<8x16xf32>,
    %105 = vector.extract_strided_slice %91 {offsets = [0, 80], sizes = [8, 16], strides = [1, 1]} : vector<8x128xf32> to vector<8x16xf32>
    %c0_48 = arith.constant 0 : index
    %c800 = arith.constant 800 : index
    %106 = vector.load %arg2[%c0_48, %c800] : memref<8x1152xf32, #tpu.memory_space<vmem>>, vector<8x16xf32>
    tpu.vector_store %arg2[%c0_48, %c800], %105 {strides = array<i32>} : memref<8x1152xf32, #tpu.memory_space<vmem>>, vector<8x16xf32>,
    %107 = vector.extract_strided_slice %91 {offsets = [0, 96], sizes = [8, 16], strides = [1, 1]} : vector<8x128xf32> to vector<8x16xf32>
    %c0_49 = arith.constant 0 : index
    %c944 = arith.constant 944 : index
    %108 = vector.load %arg2[%c0_49, %c944] : memref<8x1152xf32, #tpu.memory_space<vmem>>, vector<8x16xf32>
    tpu.vector_store %arg2[%c0_49, %c944], %107 {strides = array<i32>} : memref<8x1152xf32, #tpu.memory_space<vmem>>, vector<8x16xf32>,
    %109 = vector.extract_strided_slice %91 {offsets = [0, 112], sizes = [8, 16], strides = [1, 1]} : vector<8x128xf32> to vector<8x16xf32>
    %c0_50 = arith.constant 0 : index
    %c1088 = arith.constant 1088 : index
    %110 = vector.load %arg2[%c0_50, %c1088] : memref<8x1152xf32, #tpu.memory_space<vmem>>, vector<8x16xf32>
    tpu.vector_store %arg2[%c0_50, %c1088], %109 {strides = array<i32>} : memref<8x1152xf32, #tpu.memory_space<vmem>>, vector<8x16xf32>,
    %111 = vector.extract_strided_slice %94 {offsets = [0, 0], sizes = [8, 16], strides = [1, 1]} : vector<8x128xf32> to vector<8x16xf32>
    %c0_51 = arith.constant 0 : index
    %c96 = arith.constant 96 : index
    %112 = vector.load %arg2[%c0_51, %c96] : memref<8x1152xf32, #tpu.memory_space<vmem>>, vector<8x16xf32>
    tpu.vector_store %arg2[%c0_51, %c96], %111 {strides = array<i32>} : memref<8x1152xf32, #tpu.memory_space<vmem>>, vector<8x16xf32>,
    %113 = vector.extract_strided_slice %94 {offsets = [0, 16], sizes = [8, 16], strides = [1, 1]} : vector<8x128xf32> to vector<8x16xf32>
    %c0_52 = arith.constant 0 : index
    %c240 = arith.constant 240 : index
    %114 = vector.load %arg2[%c0_52, %c240] : memref<8x1152xf32, #tpu.memory_space<vmem>>, vector<8x16xf32>
    tpu.vector_store %arg2[%c0_52, %c240], %113 {strides = array<i32>} : memref<8x1152xf32, #tpu.memory_space<vmem>>, vector<8x16xf32>,
    %115 = vector.extract_strided_slice %94 {offsets = [0, 32], sizes = [8, 16], strides = [1, 1]} : vector<8x128xf32> to vector<8x16xf32>
    %c0_53 = arith.constant 0 : index
    %c384 = arith.constant 384 : index
    %116 = vector.load %arg2[%c0_53, %c384] : memref<8x1152xf32, #tpu.memory_space<vmem>>, vector<8x16xf32>
    tpu.vector_store %arg2[%c0_53, %c384], %115 {strides = array<i32>} : memref<8x1152xf32, #tpu.memory_space<vmem>>, vector<8x16xf32>,
    %117 = vector.extract_strided_slice %94 {offsets = [0, 48], sizes = [8, 16], strides = [1, 1]} : vector<8x128xf32> to vector<8x16xf32>
    %c0_54 = arith.constant 0 : index
    %c528 = arith.constant 528 : index
    %118 = vector.load %arg2[%c0_54, %c528] : memref<8x1152xf32, #tpu.memory_space<vmem>>, vector<8x16xf32>
    tpu.vector_store %arg2[%c0_54, %c528], %117 {strides = array<i32>} : memref<8x1152xf32, #tpu.memory_space<vmem>>, vector<8x16xf32>,
    %119 = vector.extract_strided_slice %94 {offsets = [0, 64], sizes = [8, 16], strides = [1, 1]} : vector<8x128xf32> to vector<8x16xf32>
    %c0_55 = arith.constant 0 : index
    %c672 = arith.constant 672 : index
    %120 = vector.load %arg2[%c0_55, %c672] : memref<8x1152xf32, #tpu.memory_space<vmem>>, vector<8x16xf32>
    tpu.vector_store %arg2[%c0_55, %c672], %119 {strides = array<i32>} : memref<8x1152xf32, #tpu.memory_space<vmem>>, vector<8x16xf32>,
    %121 = vector.extract_strided_slice %94 {offsets = [0, 80], sizes = [8, 16], strides = [1, 1]} : vector<8x128xf32> to vector<8x16xf32>
    %c0_56 = arith.constant 0 : index
    %c816 = arith.constant 816 : index
    %122 = vector.load %arg2[%c0_56, %c816] : memref<8x1152xf32, #tpu.memory_space<vmem>>, vector<8x16xf32>
    tpu.vector_store %arg2[%c0_56, %c816], %121 {strides = array<i32>} : memref<8x1152xf32, #tpu.memory_space<vmem>>, vector<8x16xf32>,
    %123 = vector.extract_strided_slice %94 {offsets = [0, 96], sizes = [8, 16], strides = [1, 1]} : vector<8x128xf32> to vector<8x16xf32>
    %c0_57 = arith.constant 0 : index
    %c960 = arith.constant 960 : index
    %124 = vector.load %arg2[%c0_57, %c960] : memref<8x1152xf32, #tpu.memory_space<vmem>>, vector<8x16xf32>
    tpu.vector_store %arg2[%c0_57, %c960], %123 {strides = array<i32>} : memref<8x1152xf32, #tpu.memory_space<vmem>>, vector<8x16xf32>,
    %125 = vector.extract_strided_slice %94 {offsets = [0, 112], sizes = [8, 16], strides = [1, 1]} : vector<8x128xf32> to vector<8x16xf32>
    %c0_58 = arith.constant 0 : index
    %c1104 = arith.constant 1104 : index
    %126 = vector.load %arg2[%c0_58, %c1104] : memref<8x1152xf32, #tpu.memory_space<vmem>>, vector<8x16xf32>
    tpu.vector_store %arg2[%c0_58, %c1104], %125 {strides = array<i32>} : memref<8x1152xf32, #tpu.memory_space<vmem>>, vector<8x16xf32>,
    %cst_59 = arith.constant 2.000000e+00 : f32
    %127 = vector.broadcast %cst_59 : f32 to vector<8x128xf32>
    %128 = arith.mulf %127, %91 : vector<8x128xf32>
    %129 = arith.mulf %128, %94 : vector<8x128xf32>
    %130 = arith.mulf %94, %94 : vector<8x128xf32>
    %131 = arith.mulf %91, %91 : vector<8x128xf32>
    %132 = arith.subf %130, %131 : vector<8x128xf32>
    %133 = vector.extract_strided_slice %129 {offsets = [0, 0], sizes = [8, 16], strides = [1, 1]} : vector<8x128xf32> to vector<8x16xf32>
    %c0_60 = arith.constant 0 : index
    %c112 = arith.constant 112 : index
    %134 = vector.load %arg2[%c0_60, %c112] : memref<8x1152xf32, #tpu.memory_space<vmem>>, vector<8x16xf32>
    tpu.vector_store %arg2[%c0_60, %c112], %133 {strides = array<i32>} : memref<8x1152xf32, #tpu.memory_space<vmem>>, vector<8x16xf32>,
    %135 = vector.extract_strided_slice %129 {offsets = [0, 16], sizes = [8, 16], strides = [1, 1]} : vector<8x128xf32> to vector<8x16xf32>
    %c0_61 = arith.constant 0 : index
    %c256 = arith.constant 256 : index
    %136 = vector.load %arg2[%c0_61, %c256] : memref<8x1152xf32, #tpu.memory_space<vmem>>, vector<8x16xf32>
    tpu.vector_store %arg2[%c0_61, %c256], %135 {strides = array<i32>} : memref<8x1152xf32, #tpu.memory_space<vmem>>, vector<8x16xf32>,
    %137 = vector.extract_strided_slice %129 {offsets = [0, 32], sizes = [8, 16], strides = [1, 1]} : vector<8x128xf32> to vector<8x16xf32>
    %c0_62 = arith.constant 0 : index
    %c400 = arith.constant 400 : index
    %138 = vector.load %arg2[%c0_62, %c400] : memref<8x1152xf32, #tpu.memory_space<vmem>>, vector<8x16xf32>
    tpu.vector_store %arg2[%c0_62, %c400], %137 {strides = array<i32>} : memref<8x1152xf32, #tpu.memory_space<vmem>>, vector<8x16xf32>,
    %139 = vector.extract_strided_slice %129 {offsets = [0, 48], sizes = [8, 16], strides = [1, 1]} : vector<8x128xf32> to vector<8x16xf32>
    %c0_63 = arith.constant 0 : index
    %c544 = arith.constant 544 : index
    %140 = vector.load %arg2[%c0_63, %c544] : memref<8x1152xf32, #tpu.memory_space<vmem>>, vector<8x16xf32>
    tpu.vector_store %arg2[%c0_63, %c544], %139 {strides = array<i32>} : memref<8x1152xf32, #tpu.memory_space<vmem>>, vector<8x16xf32>,
    %141 = vector.extract_strided_slice %129 {offsets = [0, 64], sizes = [8, 16], strides = [1, 1]} : vector<8x128xf32> to vector<8x16xf32>
    %c0_64 = arith.constant 0 : index
    %c688 = arith.constant 688 : index
    %142 = vector.load %arg2[%c0_64, %c688] : memref<8x1152xf32, #tpu.memory_space<vmem>>, vector<8x16xf32>
    tpu.vector_store %arg2[%c0_64, %c688], %141 {strides = array<i32>} : memref<8x1152xf32, #tpu.memory_space<vmem>>, vector<8x16xf32>,
    %143 = vector.extract_strided_slice %129 {offsets = [0, 80], sizes = [8, 16], strides = [1, 1]} : vector<8x128xf32> to vector<8x16xf32>
    %c0_65 = arith.constant 0 : index
    %c832 = arith.constant 832 : index
    %144 = vector.load %arg2[%c0_65, %c832] : memref<8x1152xf32, #tpu.memory_space<vmem>>, vector<8x16xf32>
    tpu.vector_store %arg2[%c0_65, %c832], %143 {strides = array<i32>} : memref<8x1152xf32, #tpu.memory_space<vmem>>, vector<8x16xf32>,
    %145 = vector.extract_strided_slice %129 {offsets = [0, 96], sizes = [8, 16], strides = [1, 1]} : vector<8x128xf32> to vector<8x16xf32>
    %c0_66 = arith.constant 0 : index
    %c976 = arith.constant 976 : index
    %146 = vector.load %arg2[%c0_66, %c976] : memref<8x1152xf32, #tpu.memory_space<vmem>>, vector<8x16xf32>
    tpu.vector_store %arg2[%c0_66, %c976], %145 {strides = array<i32>} : memref<8x1152xf32, #tpu.memory_space<vmem>>, vector<8x16xf32>,
    %147 = vector.extract_strided_slice %129 {offsets = [0, 112], sizes = [8, 16], strides = [1, 1]} : vector<8x128xf32> to vector<8x16xf32>
    %c0_67 = arith.constant 0 : index
    %c1120 = arith.constant 1120 : index
    %148 = vector.load %arg2[%c0_67, %c1120] : memref<8x1152xf32, #tpu.memory_space<vmem>>, vector<8x16xf32>
    tpu.vector_store %arg2[%c0_67, %c1120], %147 {strides = array<i32>} : memref<8x1152xf32, #tpu.memory_space<vmem>>, vector<8x16xf32>,
    %149 = vector.extract_strided_slice %132 {offsets = [0, 0], sizes = [8, 16], strides = [1, 1]} : vector<8x128xf32> to vector<8x16xf32>
    %c0_68 = arith.constant 0 : index
    %c128 = arith.constant 128 : index
    %150 = vector.load %arg2[%c0_68, %c128] : memref<8x1152xf32, #tpu.memory_space<vmem>>, vector<8x16xf32>
    tpu.vector_store %arg2[%c0_68, %c128], %149 {strides = array<i32>} : memref<8x1152xf32, #tpu.memory_space<vmem>>, vector<8x16xf32>,
    %151 = vector.extract_strided_slice %132 {offsets = [0, 16], sizes = [8, 16], strides = [1, 1]} : vector<8x128xf32> to vector<8x16xf32>
    %c0_69 = arith.constant 0 : index
    %c272 = arith.constant 272 : index
    %152 = vector.load %arg2[%c0_69, %c272] : memref<8x1152xf32, #tpu.memory_space<vmem>>, vector<8x16xf32>
    tpu.vector_store %arg2[%c0_69, %c272], %151 {strides = array<i32>} : memref<8x1152xf32, #tpu.memory_space<vmem>>, vector<8x16xf32>,
    %153 = vector.extract_strided_slice %132 {offsets = [0, 32], sizes = [8, 16], strides = [1, 1]} : vector<8x128xf32> to vector<8x16xf32>
    %c0_70 = arith.constant 0 : index
    %c416 = arith.constant 416 : index
    %154 = vector.load %arg2[%c0_70, %c416] : memref<8x1152xf32, #tpu.memory_space<vmem>>, vector<8x16xf32>
    tpu.vector_store %arg2[%c0_70, %c416], %153 {strides = array<i32>} : memref<8x1152xf32, #tpu.memory_space<vmem>>, vector<8x16xf32>,
    %155 = vector.extract_strided_slice %132 {offsets = [0, 48], sizes = [8, 16], strides = [1, 1]} : vector<8x128xf32> to vector<8x16xf32>
    %c0_71 = arith.constant 0 : index
    %c560 = arith.constant 560 : index
    %156 = vector.load %arg2[%c0_71, %c560] : memref<8x1152xf32, #tpu.memory_space<vmem>>, vector<8x16xf32>
    tpu.vector_store %arg2[%c0_71, %c560], %155 {strides = array<i32>} : memref<8x1152xf32, #tpu.memory_space<vmem>>, vector<8x16xf32>,
    %157 = vector.extract_strided_slice %132 {offsets = [0, 64], sizes = [8, 16], strides = [1, 1]} : vector<8x128xf32> to vector<8x16xf32>
    %c0_72 = arith.constant 0 : index
    %c704 = arith.constant 704 : index
    %158 = vector.load %arg2[%c0_72, %c704] : memref<8x1152xf32, #tpu.memory_space<vmem>>, vector<8x16xf32>
    tpu.vector_store %arg2[%c0_72, %c704], %157 {strides = array<i32>} : memref<8x1152xf32, #tpu.memory_space<vmem>>, vector<8x16xf32>,
    %159 = vector.extract_strided_slice %132 {offsets = [0, 80], sizes = [8, 16], strides = [1, 1]} : vector<8x128xf32> to vector<8x16xf32>
    %c0_73 = arith.constant 0 : index
    %c848 = arith.constant 848 : index
    %160 = vector.load %arg2[%c0_73, %c848] : memref<8x1152xf32, #tpu.memory_space<vmem>>, vector<8x16xf32>
    tpu.vector_store %arg2[%c0_73, %c848], %159 {strides = array<i32>} : memref<8x1152xf32, #tpu.memory_space<vmem>>, vector<8x16xf32>,
    %161 = vector.extract_strided_slice %132 {offsets = [0, 96], sizes = [8, 16], strides = [1, 1]} : vector<8x128xf32> to vector<8x16xf32>
    %c0_74 = arith.constant 0 : index
    %c992 = arith.constant 992 : index
    %162 = vector.load %arg2[%c0_74, %c992] : memref<8x1152xf32, #tpu.memory_space<vmem>>, vector<8x16xf32>
    tpu.vector_store %arg2[%c0_74, %c992], %161 {strides = array<i32>} : memref<8x1152xf32, #tpu.memory_space<vmem>>, vector<8x16xf32>,
    %163 = vector.extract_strided_slice %132 {offsets = [0, 112], sizes = [8, 16], strides = [1, 1]} : vector<8x128xf32> to vector<8x16xf32>
    %c0_75 = arith.constant 0 : index
    %c1136 = arith.constant 1136 : index
    %164 = vector.load %arg2[%c0_75, %c1136] : memref<8x1152xf32, #tpu.memory_space<vmem>>, vector<8x16xf32>
    tpu.vector_store %arg2[%c0_75, %c1136], %163 {strides = array<i32>} : memref<8x1152xf32, #tpu.memory_space<vmem>>, vector<8x16xf32>,
    return
  }
  func.func @transform_0(%arg0: i32) -> (i32, i32) {
    %c0_i32 = arith.constant 0 : i32
    %c0_i32_0 = arith.constant 0 : i32
    return %arg0, %c0_i32 : i32, i32
  }
  func.func @transform_1(%arg0: i32) -> (i32, i32) {
    %c0_i32 = arith.constant 0 : i32
    %c0_i32_0 = arith.constant 0 : i32
    return %arg0, %c0_i32 : i32, i32
  }
}

</mosaic_0001>

<llo_original>
// kernel: tpu_custom_call.1
$region0: #{tpu_custom_call.1}
  #allocation0 [shape = 'u32[]', space=smem, size = 0x4, offset = 0x4, fixed_abs, tag = 'smem constant byte address 0x4 - core index']
  #allocation1 [shape = 'u32[144,128]{1,0:T(1,128)}', space=vmem, size = 0x12000, scoped, tag = 'internal scratch']
  %s0 = inlined_call_operand.hbm [shape: f32[8,128], index: 0, kind: input, shape index: {}]
  %s1 = inlined_call_operand.hbm [shape: f32[8,1152], index: 1, kind: output, shape index: {}]
  %s2 = sld [smem:[#allocation0]]
  $region18: #{tpu_custom_call.1} parent=0
    _
  %s4 = ssub.s32 1, %s2
  %s5 = scalar_select 0, %s4, %s2
  $region1: #{tpu_custom_call.1} parent=0
    #allocation2 [shape = 'u8[4096]{0}', space=vmem, size = 0x1000, scoped, tag = 'input window, operand 0, single buffered']
    #allocation3 [shape = 's32[1]{0}', space=sflag, size = 0x4, scoped, tag = 'scoped memory for tpu_custom_call.1']
    #allocation4 [shape = 's32[1]{0}', space=sflag, size = 0x4, scoped, tag = 'scoped memory for tpu_custom_call.1']
    #allocation5 [shape = 'u8[36864]{0}', space=vmem, size = 0x9000, scoped, tag = 'output window, operand 0, single buffered']
    %6 = vsyncpa [#allocation3], 0
    %7 = vsyncpa [#allocation4], 0
    // Predicated region
    $region2: #{tpu_custom_call.1} parent=1 // pred_check
      _
    $region3: #{tpu_custom_call.1} parent=1 // pred_check_branch
      %9 = sbr.rel (0) target = $region5
    $region4: #{tpu_custom_call.1} parent=1 // pred_region
      %s11 = ssub.s32 128, 128
      %12 = vsyncadd [#allocation3], %s11
      %s14 = sshll.u32 [#allocation2], 4
      %s15 = int_to_ptr.vmem [resolvable:$true] %s14
      %17 = dma.hbm_to_vmem [thread:$0]  %s0, 128, %s15, [#allocation3]
    $region5: #{tpu_custom_call.1} parent=1 // pred_fallthru
      _
    // Predicated region
    $region6: #{tpu_custom_call.1} parent=1 // pred_check
      _
    $region7: #{tpu_custom_call.1} parent=1 // pred_check_branch
      %19 = sbr.rel (0) target = $region9
    $region8: #{tpu_custom_call.1} parent=1 // pred_region
      %20 = dma.done [#allocation3], 128
    $region9: #{tpu_custom_call.1} parent=1 // pred_fallthru
      _
    %v21 = vld [vmem:[#allocation2] sm:$0xff]
    %vm22 = vcmask 130048
    %23 = vst.msk [vmem:[#allocation5] sm:$0xff] %vm22, %v21
    %vm24 = vcmask 261248
    %25 = vst.msk [vmem:[#allocation5 + $0x8] sm:$0xff] %vm24, %v21
    %vm26 = vcmask 392448
    %27 = vst.msk [vmem:[#allocation5 + $0x10] sm:$0xff] %vm26, %v21
    %vm28 = vcmask 523648
    %29 = vst.msk [vmem:[#allocation5 + $0x18] sm:$0xff] %vm28, %v21
    %vm30 = vcmask 654848
    %31 = vst.msk [vmem:[#allocation5 + $0x20] sm:$0xff] %vm30, %v21
    %vm32 = vcmask 786048
    %33 = vst.msk [vmem:[#allocation5 + $0x28] sm:$0xff] %vm32, %v21
    %vm34 = vcmask 917248
    %35 = vst.msk [vmem:[#allocation5 + $0x30] sm:$0xff] %vm34, %v21
    %vm36 = vcmask 1048448
    %37 = vst.msk [vmem:[#allocation5 + $0x38] sm:$0xff] %vm36, %v21
    %v38 = vand.u32 2147483647, %v21
    %vm39 = vcmp.le.f32.partialorder %v38, 0.7853982
    %vm40 = vcmp.lt.s32.totalorder %v21, 0
    %v41 = vand.u32 %v21, 2139095040
    %v42 = vshrl.u32 %v41, 23
    %v43 = vsub.s32 %v42, 127
    %v44 = vand.u32 2147483647, %v21
    %v45 = vand.u32 %v44, 8388607
    %v46 = vor.u32 %v45, 8388608
    %v47 = vsub.s32 0, %v46
    %v48 = vadd.s32 %v43, 1
    %vm49 = vcmp.gt.s32.totalorder %v48, 0
    %v50 = vsel %vm49, %v48, 0
    %v51 = vshrl.u32 %v50, 5
    %v52 = vand.u32 %v50, 31
    %v53 = vsub.s32 32, %v52
    %v54 = vshrl.u32 683565275, %v53
    %v55 = vshll.u32 683565275, %v52
    %v56 = vshrl.u32 2475754826, %v53
    %v57 = vor.u32 %v55, %v56
    %v58 = vshll.u32 2475754826, %v52
    %v59 = vshrl.u32 2131351028, %v53
    %v60 = vor.u32 %v58, %v59
    %v61 = vshll.u32 2131351028, %v52
    %v62 = vshrl.u32 2102212464, %v53
    %v63 = vor.u32 %v61, %v62
    %v64 = vshll.u32 2102212464, %v52
    %v65 = vshrl.u32 920167782, %v53
    %v66 = vor.u32 %v64, %v65
    %v67 = vshll.u32 920167782, %v52
    %v68 = vshrl.u32 1326507024, %v53
    %v69 = vor.u32 %v67, %v68
    %vm70 = vcmp.lt.s32.totalorder %v51, 1
    %vm71 = vcmp.lt.s32.totalorder %v51, 2
    %vm72 = vcmp.lt.s32.totalorder %v51, 3
    %vm73 = vcmp.lt.s32.totalorder %v51, 4
    %v74 = vsel %vm70, %v54, %v57
    %v75 = vsel %vm73, %v63, 2102212464
    %v76 = vsel %vm72, %v60, %v75
    %v77 = vsel %vm71, %v74, %v76
    %v78 = vsel %vm70, %v57, %v60
    %v79 = vsel %vm73, %v66, 920167782
    %v80 = vsel %vm72, %v63, %v79
    %v81 = vsel %vm71, %v78, %v80
    %v82 = vsel %vm70, %v60, %v63
    %v83 = vsel %vm73, %v69, 1326507024
    %v84 = vsel %vm72, %v66, %v83
    %v85 = vsel %vm71, %v82, %v84
    %v86 = vshll.u32 %v46, 8
    %v87 = vmul.u32.u64.compose %v86, %v85
    %v88 = vextract.low.u32 %v87
    %v89 = vextract.high.u32 %v87
    %v90 = vmul.u32.u64.compose %v86, %v81
    %v91 = vextract.low.u32 %v90
    %v92 = vextract.high.u32 %v90
    %v93 = vmul.u32 %v86, %v77
    %v94 = vadd.s32 %v89, %v91
    %vm95 = vc.u32 %v89, %v91
    %v96 = vadd.s32 %v92, 1
    %v97 = vsel %vm95, %v96, %v92
    %v98 = vadd.s32 %v93, %v97
    %v99 = vadd.s32 %v98, 536870912
    %v100 = vshrl.u32 %v99, 30
    %v101 = vshll.u32 %v100, 30
    %v102 = vsub.s32 %v98, %v101
    %vm103 = vcmp.lt.s32.totalorder %v102, 0
    %v104 = vsub.s32 0, %v102
    %v105 = vsel %vm103, %v104, %v102
    %v106 = vclz %v105
    %v107 = vsub.s32 %v106, 2
    %vm108 = vcmp.gt.s32.totalorder 0, %v107
    %v109 = vsel %vm108, 0, %v107
    %v110 = vsub.s32 32, %v109
    %v111 = vshll.u32 %v102, %v109
    %v112 = vshrl.u32 %v94, %v110
    %v113 = vor.u32 %v111, %v112
    %v114 = vsub.s32 4294967266, %v109
    %v115 = vadd.s32 %v114, 127
    %v116 = vshll.u32 %v115, 23
    %v117 = vor.u32 4788187, %v116
    %v118 = vand.u32 2147483647, %v117
    %v120 = vcvt.s32.f32 %v113
    %v121 = vmul.f32 %v120, %v118
    %v122 = vxor.u32 %v121, 2147483648
    %v123 = vsel %vm40, %v122, %v121
    %v124 = vsub.s32 4, %v100
    %v125 = vsel %vm40, %v124, %v100
    %v126 = vsel %vm39, %v21, %v123
    %v127 = vsel %vm39, 0, %v125
    %v128 = vcosq.f32.pop %v126
    %v129 = vsinq.f32.pop %v126
    %vm130 = vweird.f32 %v21
    %v131 = vadd.s32 %v127, 3
    %v132 = vand.u32 %v131, 3
    %vm133 = vcmp.lt.s32.totalorder %v132, 2
    %vm134 = vcmp.eq.s32.totalorder %v132, 0
    %v135 = vxor.u32 %v129, 2147483648
    %v136 = vsel %vm134, %v128, %v135
    %vm137 = vcmp.eq.s32.totalorder %v132, 2
    %v138 = vxor.u32 %v128, 2147483648
    %v139 = vsel %vm137, %v138, %v129
    %v140 = vsel %vm133, %v136, %v139
    %v141 = vsel %vm130, nan, %v140
    %v142 = vand.u32 2147483647, %v21
    %vm143 = vcmp.le.f32.partialorder %v142, 0.7853982
    %vm144 = vcmp.lt.s32.totalorder %v21, 0
    %v145 = vand.u32 %v21, 2139095040
    %v146 = vshrl.u32 %v145, 23
    %v147 = vsub.s32 %v146, 127
    %v148 = vand.u32 2147483647, %v21
    %v149 = vand.u32 %v148, 8388607
    %v150 = vor.u32 %v149, 8388608
    %v151 = vsub.s32 0, %v150
    %v152 = vadd.s32 %v147, 1
    %vm153 = vcmp.gt.s32.totalorder %v152, 0
    %v154 = vsel %vm153, %v152, 0
    %v155 = vshrl.u32 %v154, 5
    %v156 = vand.u32 %v154, 31
    %v157 = vsub.s32 32, %v156
    %v158 = vshrl.u32 683565275, %v157
    %v159 = vshll.u32 683565275, %v156
    %v160 = vshrl.u32 2475754826, %v157
    %v161 = vor.u32 %v159, %v160
    %v162 = vshll.u32 2475754826, %v156
    %v163 = vshrl.u32 2131351028, %v157
    %v164 = vor.u32 %v162, %v163
    %v165 = vshll.u32 2131351028, %v156
    %v166 = vshrl.u32 2102212464, %v157
    %v167 = vor.u32 %v165, %v166
    %v168 = vshll.u32 2102212464, %v156
    %v169 = vshrl.u32 920167782, %v157
    %v170 = vor.u32 %v168, %v169
    %v171 = vshll.u32 920167782, %v156
    %v172 = vshrl.u32 1326507024, %v157
    %v173 = vor.u32 %v171, %v172
    %vm174 = vcmp.lt.s32.totalorder %v155, 1
    %vm175 = vcmp.lt.s32.totalorder %v155, 2
    %vm176 = vcmp.lt.s32.totalorder %v155, 3
    %vm177 = vcmp.lt.s32.totalorder %v155, 4
    %v178 = vsel %vm174, %v158, %v161
    %v179 = vsel %vm177, %v167, 2102212464
    %v180 = vsel %vm176, %v164, %v179
    %v181 = vsel %vm175, %v178, %v180
    %v182 = vsel %vm174, %v161, %v164
    %v183 = vsel %vm177, %v170, 920167782
    %v184 = vsel %vm176, %v167, %v183
    %v185 = vsel %vm175, %v182, %v184
    %v186 = vsel %vm174, %v164, %v167
    %v187 = vsel %vm177, %v173, 1326507024
    %v188 = vsel %vm176, %v170, %v187
    %v189 = vsel %vm175, %v186, %v188
    %v190 = vshll.u32 %v150, 8
    %v191 = vmul.u32.u64.compose %v190, %v189
    %v192 = vextract.low.u32 %v191
    %v193 = vextract.high.u32 %v191
    %v194 = vmul.u32.u64.compose %v190, %v185
    %v195 = vextract.low.u32 %v194
    %v196 = vextract.high.u32 %v194
    %v197 = vmul.u32 %v190, %v181
    %v198 = vadd.s32 %v193, %v195
    %vm199 = vc.u32 %v193, %v195
    %v200 = vadd.s32 %v196, 1
    %v201 = vsel %vm199, %v200, %v196
    %v202 = vadd.s32 %v197, %v201
    %v203 = vadd.s32 %v202, 536870912
    %v204 = vshrl.u32 %v203, 30
    %v205 = vshll.u32 %v204, 30
    %v206 = vsub.s32 %v202, %v205
    %vm207 = vcmp.lt.s32.totalorder %v206, 0
    %v208 = vsub.s32 0, %v206
    %v209 = vsel %vm207, %v208, %v206
    %v210 = vclz %v209
    %v211 = vsub.s32 %v210, 2
    %vm212 = vcmp.gt.s32.totalorder 0, %v211
    %v213 = vsel %vm212, 0, %v211
    %v214 = vsub.s32 32, %v213
    %v215 = vshll.u32 %v206, %v213
    %v216 = vshrl.u32 %v198, %v214
    %v217 = vor.u32 %v215, %v216
    %v218 = vsub.s32 4294967266, %v213
    %v219 = vadd.s32 %v218, 127
    %v220 = vshll.u32 %v219, 23
    %v221 = vor.u32 4788187, %v220
    %v222 = vand.u32 2147483647, %v221
    %v224 = vcvt.s32.f32 %v217
    %v225 = vmul.f32 %v224, %v222
    %v226 = vxor.u32 %v225, 2147483648
    %v227 = vsel %vm144, %v226, %v225
    %v228 = vsub.s32 4, %v204
    %v229 = vsel %vm144, %v228, %v204
    %v230 = vsel %vm143, %v21, %v227
    %v231 = vsel %vm143, 0, %v229
    %v232 = vcosq.f32.pop %v230
    %v233 = vsinq.f32.pop %v230
    %vm234 = vweird.f32 %v21
    %v235 = vand.u32 %v231, 3
    %vm236 = vcmp.lt.s32.totalorder %v235, 2
    %vm237 = vcmp.eq.s32.totalorder %v235, 0
    %v238 = vxor.u32 %v233, 2147483648
    %v239 = vsel %vm237, %v232, %v238
    %vm240 = vcmp.eq.s32.totalorder %v235, 2
    %v241 = vxor.u32 %v232, 2147483648
    %v242 = vsel %vm240, %v241, %v233
    %v243 = vsel %vm236, %v239, %v242
    %v244 = vsel %vm234, nan, %v243
    %246 = vrot.lane.b32.xlu0 %v141, 16
    %v247 = vpop.permute.xlu0 %246
    %249 = vst.msk [vmem:[#allocation5] sm:$0xff] %vm24, %v247
    %250 = vst.msk [vmem:[#allocation5 + $0x8] sm:$0xff] %vm26, %v247
    %251 = vst.msk [vmem:[#allocation5 + $0x10] sm:$0xff] %vm28, %v247
    %252 = vst.msk [vmem:[#allocation5 + $0x18] sm:$0xff] %vm30, %v247
    %253 = vst.msk [vmem:[#allocation5 + $0x20] sm:$0xff] %vm32, %v247
    %254 = vst.msk [vmem:[#allocation5 + $0x28] sm:$0xff] %vm34, %v247
    %255 = vst.msk [vmem:[#allocation5 + $0x30] sm:$0xff] %vm36, %v247
    %256 = vst.msk [vmem:[#allocation5 + $0x40] sm:$0xff] %vm22, %v247
    %258 = vrot.lane.b32.xlu0 %v244, 32
    %v259 = vpop.permute.xlu0 %258
    %261 = vst.msk [vmem:[#allocation5] sm:$0xff] %vm26, %v259
    %262 = vst.msk [vmem:[#allocation5 + $0x8] sm:$0xff] %vm28, %v259
    %263 = vst.msk [vmem:[#allocation5 + $0x10] sm:$0xff] %vm30, %v259
    %264 = vst.msk [vmem:[#allocation5 + $0x18] sm:$0xff] %vm32, %v259
    %265 = vst.msk [vmem:[#allocation5 + $0x20] sm:$0xff] %vm34, %v259
    %266 = vst.msk [vmem:[#allocation5 + $0x28] sm:$0xff] %vm36, %v259
    %267 = vst.msk [vmem:[#allocation5 + $0x38] sm:$0xff] %vm22, %v259
    %268 = vst.msk [vmem:[#allocation5 + $0x40] sm:$0xff] %vm24, %v259
    %v269 = vmul.f32 %v141, 2.0
    %v270 = vmul.f32 %v269, %v244
    %v271 = vmul.f32 %v244, %v244
    %v272 = vmul.f32 %v141, %v141
    %v273 = vsub.f32 %v271, %v272
    %275 = vrot.lane.b32.xlu0 %v270, 48
    %v276 = vpop.permute.xlu0 %275
    %278 = vst.msk [vmem:[#allocation5] sm:$0xff] %vm28, %v276
    %279 = vst.msk [vmem:[#allocation5 + $0x8] sm:$0xff] %vm30, %v276
    %280 = vst.msk [vmem:[#allocation5 + $0x10] sm:$0xff] %vm32, %v276
    %281 = vst.msk [vmem:[#allocation5 + $0x18] sm:$0xff] %vm34, %v276
    %282 = vst.msk [vmem:[#allocation5 + $0x20] sm:$0xff] %vm36, %v276
    %283 = vst.msk [vmem:[#allocation5 + $0x30] sm:$0xff] %vm22, %v276
    %284 = vst.msk [vmem:[#allocation5 + $0x38] sm:$0xff] %vm24, %v276
    %285 = vst.msk [vmem:[#allocation5 + $0x40] sm:$0xff] %vm26, %v276
    %287 = vrot.lane.b32.xlu0 %v273, 64
    %v288 = vpop.permute.xlu0 %287
    %290 = vst.msk [vmem:[#allocation5] sm:$0xff] %vm30, %v288
    %291 = vst.msk [vmem:[#allocation5 + $0x8] sm:$0xff] %vm32, %v288
    %292 = vst.msk [vmem:[#allocation5 + $0x10] sm:$0xff] %vm34, %v288
    %293 = vst.msk [vmem:[#allocation5 + $0x18] sm:$0xff] %vm36, %v288
    %294 = vst.msk [vmem:[#allocation5 + $0x28] sm:$0xff] %vm22, %v288
    %295 = vst.msk [vmem:[#allocation5 + $0x30] sm:$0xff] %vm24, %v288
    %296 = vst.msk [vmem:[#allocation5 + $0x38] sm:$0xff] %vm26, %v288
    %297 = vst.msk [vmem:[#allocation5 + $0x40] sm:$0xff] %vm28, %v288
    %v298 = vmul.f32 %v270, 2.0
    %v299 = vmul.f32 %v298, %v273
    %v300 = vmul.f32 %v273, %v273
    %v301 = vmul.f32 %v270, %v270
    %v302 = vsub.f32 %v300, %v301
    %304 = vrot.lane.b32.xlu0 %v299, 80
    %v305 = vpop.permute.xlu0 %304
    %307 = vst.msk [vmem:[#allocation5] sm:$0xff] %vm32, %v305
    %308 = vst.msk [vmem:[#allocation5 + $0x8] sm:$0xff] %vm34, %v305
    %309 = vst.msk [vmem:[#allocation5 + $0x10] sm:$0xff] %vm36, %v305
    %310 = vst.msk [vmem:[#allocation5 + $0x20] sm:$0xff] %vm22, %v305
    %311 = vst.msk [vmem:[#allocation5 + $0x28] sm:$0xff] %vm24, %v305
    %312 = vst.msk [vmem:[#allocation5 + $0x30] sm:$0xff] %vm26, %v305
    %313 = vst.msk [vmem:[#allocation5 + $0x38] sm:$0xff] %vm28, %v305
    %314 = vst.msk [vmem:[#allocation5 + $0x40] sm:$0xff] %vm30, %v305
    %316 = vrot.lane.b32.xlu0 %v302, 96
    %v317 = vpop.permute.xlu0 %316
    %319 = vst.msk [vmem:[#allocation5] sm:$0xff] %vm34, %v317
    %320 = vst.msk [vmem:[#allocation5 + $0x8] sm:$0xff] %vm36, %v317
    %321 = vst.msk [vmem:[#allocation5 + $0x18] sm:$0xff] %vm22, %v317
    %322 = vst.msk [vmem:[#allocation5 + $0x20] sm:$0xff] %vm24, %v317
    %323 = vst.msk [vmem:[#allocation5 + $0x28] sm:$0xff] %vm26, %v317
    %324 = vst.msk [vmem:[#allocation5 + $0x30] sm:$0xff] %vm28, %v317
    %325 = vst.msk [vmem:[#allocation5 + $0x38] sm:$0xff] %vm30, %v317
    %326 = vst.msk [vmem:[#allocation5 + $0x40] sm:$0xff] %vm32, %v317
    %v327 = vmul.f32 %v299, 2.0
    %v328 = vmul.f32 %v327, %v302
    %v329 = vmul.f32 %v302, %v302
    %v330 = vmul.f32 %v299, %v299
    %v331 = vsub.f32 %v329, %v330
    %333 = vrot.lane.b32.xlu0 %v328, 112
    %v334 = vpop.permute.xlu0 %333
    %336 = vst.msk [vmem:[#allocation5] sm:$0xff] %vm36, %v334
    %337 = vst.msk [vmem:[#allocation5 + $0x10] sm:$0xff] %vm22, %v334
    %338 = vst.msk [vmem:[#allocation5 + $0x18] sm:$0xff] %vm24, %v334
    %339 = vst.msk [vmem:[#allocation5 + $0x20] sm:$0xff] %vm26, %v334
    %340 = vst.msk [vmem:[#allocation5 + $0x28] sm:$0xff] %vm28, %v334
    %341 = vst.msk [vmem:[#allocation5 + $0x30] sm:$0xff] %vm30, %v334
    %342 = vst.msk [vmem:[#allocation5 + $0x38] sm:$0xff] %vm32, %v334
    %343 = vst.msk [vmem:[#allocation5 + $0x40] sm:$0xff] %vm34, %v334
    %344 = vst.msk [vmem:[#allocation5 + $0x8] sm:$0xff] %vm22, %v331
    %345 = vst.msk [vmem:[#allocation5 + $0x10] sm:$0xff] %vm24, %v331
    %346 = vst.msk [vmem:[#allocation5 + $0x18] sm:$0xff] %vm26, %v331
    %347 = vst.msk [vmem:[#allocation5 + $0x20] sm:$0xff] %vm28, %v331
    %348 = vst.msk [vmem:[#allocation5 + $0x28] sm:$0xff] %vm30, %v331
    %349 = vst.msk [vmem:[#allocation5 + $0x30] sm:$0xff] %vm32, %v331
    %350 = vst.msk [vmem:[#allocation5 + $0x38] sm:$0xff] %vm34, %v331
    %351 = vst.msk [vmem:[#allocation5 + $0x40] sm:$0xff] %vm36, %v331
    // Predicated region
    $region10: #{tpu_custom_call.1} parent=1 // pred_check
      _
    $region11: #{tpu_custom_call.1} parent=1 // pred_check_branch
      %353 = sbr.rel (0) target = $region13
    $region12: #{tpu_custom_call.1} parent=1 // pred_region
      %s355 = ssub.s32 1152, 1152
      %356 = vsyncadd [#allocation4], %s355
      %s358 = sshll.u32 [#allocation5], 4
      %s359 = int_to_ptr.vmem [resolvable:$true] %s358
      %361 = dma.vmem_to_hbm [thread:$0]  %s359, 1152, %s1, [#allocation4]
    $region13: #{tpu_custom_call.1} parent=1 // pred_fallthru
      _
    // Predicated region
    $region14: #{tpu_custom_call.1} parent=1 // pred_check
      _
    $region15: #{tpu_custom_call.1} parent=1 // pred_check_branch
      %363 = sbr.rel (0) target = $region17
    $region16: #{tpu_custom_call.1} parent=1 // pred_region
      %364 = dma.done [#allocation4], 1152
    $region17: #{tpu_custom_call.1} parent=1 // pred_fallthru
      _
    %365 = vsyncpa [#allocation3], 1
    %366 = vsyncpa [#allocation4], 1

</llo_original>
